<compile_context>
chip_gen: v7x
topology: tpu7x:2x2x1
jax: 0.10.0
libtpu: 0.0.40
codegen_flags: <defaults>
</compile_context>

<pallas_src>
import math
import functools

import jax
import jax.numpy as jnp
from jax import lax
from jax.experimental import pallas as pl
from jax.experimental.pallas import tpu as pltpu


def gaussian_taps_1d(size, sigma):
    """1D normalized Gaussian taps as python floats (compile-time constants).

    outer(taps_h, taps_w) equals the module's 2D kernel exactly up to f32
    rounding (the per-axis 1/(sigma*sqrt(2*pi)) prefactors cancel in the final
    normalisation)."""
    mean = (size - 1) / 2.0
    taps = [math.exp(-0.5 * ((i - mean) / sigma) ** 2) for i in range(size)]
    s = sum(taps)
    return tuple(t / s for t in taps)


def make_gaussian_kernel_2d(kernel_size, sigma):
    """2D Gaussian kernel with the exact same math as the PyTorch __init__
    (used only by the pure-JAX reference)."""
    if isinstance(kernel_size, (int, float)):
        kernel_size = [int(kernel_size)] * 2
    if isinstance(sigma, (int, float)):
        sigma = [float(sigma)] * 2
    grids = jnp.meshgrid(
        *[jnp.arange(s, dtype=jnp.float32) for s in kernel_size], indexing="ij"
    )
    kernel = jnp.ones((), jnp.float32)
    for size, std, mgrid in zip(kernel_size, sigma, grids):
        mean = (size - 1) / 2.0
        kernel = kernel * (
            1.0 / (std * math.sqrt(2.0 * math.pi))
            * jnp.exp(-(((mgrid - mean) / std) ** 2) / 2.0)
        )
    return kernel / jnp.sum(kernel)


def _gaussian_sep_kernel(x_ref, o_ref, tmp_ref, *, taps_h, taps_w,
                         W, H_out, W_out, use_mxu):
    # x_ref  : VMEM (B, H, W)        input images for this grid step
    # o_ref  : VMEM (B, H_out, W_out) single filtered channel per image
    # tmp_ref: VMEM (B, H, W_out) f32 scratch (horizontal-pass result)
    kH, kW = len(taps_h), len(taps_w)
    B, H = x_ref.shape[0], x_ref.shape[1]

    x = x_ref[...].astype(jnp.float32)                 # cast exactly once

    # ---------- horizontal (lane-dim) pass -> (B, H, W_out) ----------
    if use_mxu:
        # Banded tap matrix (W, W_out): band[j + o, o] = taps_w[j].
        # Built from iota + scalar selects; taps are compile-time constants.
        r = lax.broadcasted_iota(jnp.int32, (W, W_out), 0)
        c = lax.broadcasted_iota(jnp.int32, (W, W_out), 1)
        d = r - c                                      # tap index, valid in [0, kW)
        band = jnp.zeros((W, W_out), jnp.float32)
        for j, wj in enumerate(taps_w):
            band = jnp.where(d == j, jnp.float32(wj), band)
        x2 = x.reshape(B * H, W)
        tmp = jnp.dot(x2, band, preferred_element_type=jnp.float32)
        tmp_ref[...] = tmp.reshape(B, H, W_out)
    else:
        # Fallback for very wide images (band matrix would be too large):
        # lane-offset slices + VPU multiply-add.
        tmp = x[:, :, 0:W_out] * taps_w[0]
        for j in range(1, kW):
            tmp = tmp + x[:, :, j:j + W_out] * taps_w[j]
        tmp_ref[...] = tmp

    # ---------- vertical (sublane-dim) pass -> (B, H_out, W_out) ----------
    # Sublane-offset slices of the VMEM scratch ref = native offset loads.
    acc = tmp_ref[:, 0:H_out, :] * taps_h[0]
    for i in range(1, kH):
        acc = acc + tmp_ref[:, i:i + H_out, :] * taps_h[i]

    o_ref[...] = acc.astype(o_ref.dtype)               # cast exactly once


def _vmem_capacity_bytes():
    try:
        return int(pltpu.get_tpu_info().vmem_capacity_bytes)
    except Exception:
        return 64 * 1024 * 1024   # conservative fallback (v7x per-core VMEM)


def _pick_batch_block(N, H, W, H_out, W_out, budget_bytes):
    """Largest divisor of N whose double-buffered blocks fit the VMEM budget,
    while keeping >=2 grid steps (feeds both v7x TensorCores) when N >= 2."""
    per_image = 4 * (2 * H * W + 2 * H_out * W_out + H * W_out)
    cap = max(1, budget_bytes // max(per_image, 1))
    if N >= 2:
        cap = min(cap, N // 2)
    cap = max(1, min(cap, N))
    for b in range(cap, 0, -1):
        if N % b == 0:
            return b
    return 1


def gaussian_smoothing(x, channels, kernel_size, sigma):
    """x: (N, 1, H, W). Returns (N, channels, H-kH+1, W-kW+1) like the module."""
    if isinstance(kernel_size, (int, float)):
        kernel_size = [int(kernel_size)] * 2
    if isinstance(sigma, (int, float)):
        sigma = [float(sigma)] * 2
    kH, kW = int(kernel_size[0]), int(kernel_size[1])
    taps_h = gaussian_taps_1d(kH, float(sigma[0]))
    taps_w = gaussian_taps_1d(kW, float(sigma[1]))

    N, Cin, H, W = x.shape
    assert Cin == 1, "module's conv has in_channels=1 (groups=1)"
    H_out, W_out = H - kH + 1, W - kW + 1

    x_nhw = x.reshape(N, H, W)                         # drop singleton channel dim

    vmem_cap = _vmem_capacity_bytes()
    B = _pick_batch_block(N, H, W, H_out, W_out, vmem_cap // 4)
    use_mxu = W <= 512                                 # keep the (W, W_out) band small

    kernel = functools.partial(
        _gaussian_sep_kernel, taps_h=taps_h, taps_w=taps_w,
        W=W, H_out=H_out, W_out=W_out, use_mxu=use_mxu)

    y = pl.pallas_call(
        kernel,
        out_shape=jax.ShapeDtypeStruct((N, H_out, W_out), x.dtype),
        grid_spec=pltpu.PrefetchScalarGridSpec(
            num_scalar_prefetch=0,
            grid=(N // B,),
            in_specs=[pl.BlockSpec((B, H, W), lambda n: (n, 0, 0))],
            out_specs=pl.BlockSpec((B, H_out, W_out), lambda n: (n, 0, 0)),
            scratch_shapes=[pltpu.VMEM((B, H, W_out), jnp.float32)],
        ),
        compiler_params=pltpu.CompilerParams(
            dimension_semantics=("parallel",),
            vmem_limit_bytes=vmem_cap // 2,
        ),
    )(x_nhw)

    # The module replicates the identical Gaussian filter over `channels` output
    # channels; do that as a cheap XLA broadcast OUTSIDE the kernel.
    return jnp.broadcast_to(y[:, None, :, :], (N, channels, H_out, W_out))


def _reference(x, channels, kernel_size, sigma):
    """Pure-JAX reference == F.conv2d(x, weight.repeat(C,1,1,1), padding=0)."""
    w2d = make_gaussian_kernel_2d(kernel_size, sigma)
    w = jnp.broadcast_to(w2d[None, None], (channels, 1, *w2d.shape))
    return lax.conv_general_dilated(
        x, w, window_strides=(1, 1), padding="VALID",
        dimension_numbers=("NCHW", "OIHW", "NCHW"),
        precision=lax.Precision.HIGHEST)


if __name__ == "__main__":
    N, channels, H, W = 2, 4, 16, 16
    kernel_size, sigma = 5, 1.0

    key = jax.random.PRNGKey(0)
    x = jax.random.normal(key, (N, 1, H, W), dtype=jnp.float32)

    out = gaussian_smoothing(x, channels, kernel_size, sigma)
    out = jax.block_until_ready(out)

    ref = jax.block_until_ready(_reference(x, channels, kernel_size, sigma))
    assert out.shape == (N, channels, H - kernel_size + 1, W - kernel_size + 1)
    assert jnp.allclose(out, ref, atol=1e-4, rtol=1e-4), float(
        jnp.max(jnp.abs(out - ref)))

    print("KERNEL_OK")
</pallas_src>

<mosaic_0001>
module attributes {stable_mosaic.version = 11 : i64} {
  func.func @_gaussian_sep_kernel(%arg0: i32, %arg1: memref<1x16x16xf32, #tpu.memory_space<vmem>>, %arg2: memref<1x12x12xf32, #tpu.memory_space<vmem>>, %arg3: memref<1x16x12xf32, #tpu.memory_space<vmem>>) attributes {dimension_semantics = [#tpu.dimension_semantics<parallel>], iteration_bounds = array<i64: 2>, scalar_prefetch = 0 : i64, scratch_operands = 1 : i64, tpu.core_type = #tpu.core_type<tc>, window_params = [{transform_indices = @transform_0, window_bounds = array<i64: 1, 16, 16>}, {transform_indices = @transform_1, window_bounds = array<i64: 1, 12, 12>}]} {
    %c0 = arith.constant 0 : index
    %c0_0 = arith.constant 0 : index
    %c0_1 = arith.constant 0 : index
    %0 = vector.load %arg1[%c0, %c0_0, %c0_1] : memref<1x16x16xf32, #tpu.memory_space<vmem>>, vector<1x16x16xf32>
    %1 = tpu.iota {dimensions = array<i32: 0>} : vector<16x12xi32>
    %2 = tpu.iota {dimensions = array<i32: 1>} : vector<16x12xi32>
    %3 = arith.subi %1, %2 : vector<16x12xi32>
    %cst = arith.constant 0.000000e+00 : f32
    %4 = vector.broadcast %cst : f32 to vector<16x12xf32>
    %c0_i32 = arith.constant 0 : i32
    %5 = vector.broadcast %c0_i32 : i32 to vector<16x12xi32>
    %6 = arith.cmpi eq, %3, %5 : vector<16x12xi32>
    %cst_2 = arith.constant 0.054488685 : f32
    %7 = vector.broadcast %cst_2 : f32 to vector<16x12xf32>
    %8 = arith.select %6, %7, %4 : vector<16x12xi1>, vector<16x12xf32>
    %c1_i32 = arith.constant 1 : i32
    %9 = vector.broadcast %c1_i32 : i32 to vector<16x12xi32>
    %10 = arith.cmpi eq, %3, %9 : vector<16x12xi32>
    %cst_3 = arith.constant 0.244201347 : f32
    %11 = vector.broadcast %cst_3 : f32 to vector<16x12xf32>
    %12 = arith.select %10, %11, %8 : vector<16x12xi1>, vector<16x12xf32>
    %c2_i32 = arith.constant 2 : i32
    %13 = vector.broadcast %c2_i32 : i32 to vector<16x12xi32>
    %14 = arith.cmpi eq, %3, %13 : vector<16x12xi32>
    %cst_4 = arith.constant 0.402619958 : f32
    %15 = vector.broadcast %cst_4 : f32 to vector<16x12xf32>
    %16 = arith.select %14, %15, %12 : vector<16x12xi1>, vector<16x12xf32>
    %c3_i32 = arith.constant 3 : i32
    %17 = vector.broadcast %c3_i32 : i32 to vector<16x12xi32>
    %18 = arith.cmpi eq, %3, %17 : vector<16x12xi32>
    %cst_5 = arith.constant 0.244201347 : f32
    %19 = vector.broadcast %cst_5 : f32 to vector<16x12xf32>
    %20 = arith.select %18, %19, %16 : vector<16x12xi1>, vector<16x12xf32>
    %c4_i32 = arith.constant 4 : i32
    %21 = vector.broadcast %c4_i32 : i32 to vector<16x12xi32>
    %22 = arith.cmpi eq, %3, %21 : vector<16x12xi32>
    %cst_6 = arith.constant 0.054488685 : f32
    %23 = vector.broadcast %cst_6 : f32 to vector<16x12xf32>
    %24 = arith.select %22, %23, %20 : vector<16x12xi1>, vector<16x12xf32>
    %25 = vector.shape_cast %0 : vector<1x16x16xf32> to vector<16x16xf32>
    %cst_7 = arith.constant dense<0.000000e+00> : vector<16x12xf32>
    %26 = tpu.matmul %25, %24, %cst_7 {dimension_numbers = #tpu.dot_dimension_numbers<[1], [0], [0], [1], [0, 0, 1, 1], [], []>} : vector<16x16xf32>, vector<16x12xf32>, vector<16x12xf32> -> vector<16x12xf32>
    %27 = vector.shape_cast %26 : vector<16x12xf32> to vector<1x16x12xf32>
    %c0_8 = arith.constant 0 : index
    %c0_9 = arith.constant 0 : index
    %c0_10 = arith.constant 0 : index
    %28 = vector.load %arg3[%c0_8, %c0_9, %c0_10] : memref<1x16x12xf32, #tpu.memory_space<vmem>>, vector<1x16x12xf32>
    tpu.vector_store %arg3[%c0_8, %c0_9, %c0_10], %27 {strides = array<i32>} : memref<1x16x12xf32, #tpu.memory_space<vmem>>, vector<1x16x12xf32>,
    %c0_11 = arith.constant 0 : index
    %c0_12 = arith.constant 0 : index
    %c0_13 = arith.constant 0 : index
    %29 = vector.load %arg3[%c0_11, %c0_12, %c0_13] : memref<1x16x12xf32, #tpu.memory_space<vmem>>, vector<1x12x12xf32>
    %cst_14 = arith.constant 0.054488685 : f32
    %30 = vector.broadcast %cst_14 : f32 to vector<1x12x12xf32>
    %31 = arith.mulf %29, %30 : vector<1x12x12xf32>
    %c0_15 = arith.constant 0 : index
    %c1 = arith.constant 1 : index
    %c0_16 = arith.constant 0 : index
    %32 = vector.load %arg3[%c0_15, %c1, %c0_16] : memref<1x16x12xf32, #tpu.memory_space<vmem>>, vector<1x12x12xf32>
    %cst_17 = arith.constant 0.244201347 : f32
    %33 = vector.broadcast %cst_17 : f32 to vector<1x12x12xf32>
    %34 = arith.mulf %32, %33 : vector<1x12x12xf32>
    %35 = arith.addf %31, %34 : vector<1x12x12xf32>
    %c0_18 = arith.constant 0 : index
    %c2 = arith.constant 2 : index
    %c0_19 = arith.constant 0 : index
    %36 = vector.load %arg3[%c0_18, %c2, %c0_19] : memref<1x16x12xf32, #tpu.memory_space<vmem>>, vector<1x12x12xf32>
    %cst_20 = arith.constant 0.402619958 : f32
    %37 = vector.broadcast %cst_20 : f32 to vector<1x12x12xf32>
    %38 = arith.mulf %36, %37 : vector<1x12x12xf32>
    %39 = arith.addf %35, %38 : vector<1x12x12xf32>
    %c0_21 = arith.constant 0 : index
    %c3 = arith.constant 3 : index
    %c0_22 = arith.constant 0 : index
    %40 = vector.load %arg3[%c0_21, %c3, %c0_22] : memref<1x16x12xf32, #tpu.memory_space<vmem>>, vector<1x12x12xf32>
    %cst_23 = arith.constant 0.244201347 : f32
    %41 = vector.broadcast %cst_23 : f32 to vector<1x12x12xf32>
    %42 = arith.mulf %40, %41 : vector<1x12x12xf32>
    %43 = arith.addf %39, %42 : vector<1x12x12xf32>
    %c0_24 = arith.constant 0 : index
    %c4 = arith.constant 4 : index
    %c0_25 = arith.constant 0 : index
    %44 = vector.load %arg3[%c0_24, %c4, %c0_25] : memref<1x16x12xf32, #tpu.memory_space<vmem>>, vector<1x12x12xf32>
    %cst_26 = arith.constant 0.054488685 : f32
    %45 = vector.broadcast %cst_26 : f32 to vector<1x12x12xf32>
    %46 = arith.mulf %44, %45 : vector<1x12x12xf32>
    %47 = arith.addf %43, %46 : vector<1x12x12xf32>
    %c0_27 = arith.constant 0 : index
    %c0_28 = arith.constant 0 : index
    %c0_29 = arith.constant 0 : index
    %48 = vector.load %arg2[%c0_27, %c0_28, %c0_29] : memref<1x12x12xf32, #tpu.memory_space<vmem>>, vector<1x12x12xf32>
    tpu.vector_store %arg2[%c0_27, %c0_28, %c0_29], %47 {strides = array<i32>} : memref<1x12x12xf32, #tpu.memory_space<vmem>>, vector<1x12x12xf32>,
    return
  }
  func.func @transform_0(%arg0: i32) -> (i32, i32, i32) {
    %c0_i32 = arith.constant 0 : i32
    %c0_i32_0 = arith.constant 0 : i32
    %c0_i32_1 = arith.constant 0 : i32
    return %arg0, %c0_i32, %c0_i32_0 : i32, i32, i32
  }
  func.func @transform_1(%arg0: i32) -> (i32, i32, i32) {
    %c0_i32 = arith.constant 0 : i32
    %c0_i32_0 = arith.constant 0 : i32
    %c0_i32_1 = arith.constant 0 : i32
    return %arg0, %c0_i32, %c0_i32_0 : i32, i32, i32
  }
}

</mosaic_0001>

<llo_original>
// kernel: tpu_custom_call.1
$region0: #{tpu_custom_call.1}
  #allocation0 [shape = 'u32[]', space=smem, size = 0x4, offset = 0x4, fixed_abs, tag = 'smem constant byte address 0x4 - core index']
  #allocation1 [shape = 'u32[144,128]{1,0:T(1,128)}', space=vmem, size = 0x12000, scoped, tag = 'internal scratch']
  #allocation2 [shape = 'f32[1,16,12]{2,1,0:T(8,128)}', space=vmem, size = 0x2000, scoped, tag = 'scratch operand']
  %s0 = inlined_call_operand.hbm [shape: f32[2,16,16], index: 0, kind: input, shape index: {}]
  %s1 = inlined_call_operand.vmem [shape: f32[2,12,12], index: 1, kind: output, shape index: {}]
  %s2 = sld [smem:[#allocation0]]
  $region41: #{tpu_custom_call.1} parent=0
    _
  %s4 = ssub.s32 1, %s2
  %s5 = scalar_select 0, %s4, %s2
  $region1: #{tpu_custom_call.1} parent=0
    #allocation3 [shape = 'u8[16384]{0}', space=vmem, size = 0x4000, scoped, tag = 'input window, operand 0']
    #allocation4 [shape = 's32[2]{0}', space=sflag, size = 0x8, scoped, tag = 'scoped memory for tpu_custom_call.1']
    %6 = vsyncpa [#allocation4], 0
    %s7 = scalar_lea.sflag [#allocation4], 1
    %8 = vsyncpa %s7, 0
    loop: start=0, step=1, limit=4
    $region2: #{tpu_custom_call.1} parent=1 // loop_pre_header
      _
    $region3: #{tpu_custom_call.1} parent=1 // loop_header
      %s10 = sphi 0, %s14
      %p11 = scmp.ge.s32.totalorder %s10, 4
      %s20 = sphi 0, %s22
      %s23 = sphi 0, %s20
      %s24 = sphi 0, %s23
      %s40 = sphi 0, %s24
      %s46 = sphi 0, %s48
      %s49 = sphi 0, %s46
      %s50 = sphi 0, %s49
      %s66 = sphi 0, %s50
    $region4: #{tpu_custom_call.1} parent=1 // loop_header_branch
      %13 = sbr.rel (%p11) target = $region8
    $region5: #{tpu_custom_call.1} parent=1 // loop_body
      %s15 = ssub.s32 %s10, 1
      %s16 = ssub.s32 %s10, 2
      %s17 = sadd.s32 %s10, 1
      %s18 = ssub.s32 %s10, %s17
      %p19 = scmp.eq.s32.totalorder %s18, 0
      %s21 = sadd.s32 %s20, 1
      %s22 = scalar_select %p19, %s20, %s21
      %p25 = pneg %p19
      %p26 = scmp.eq.s32.totalorder %s10, 1
      %p27 = por %p25, %p26
      %p28 = scmp.ne.s32.totalorder %s20, %s23
      %p29 = scmp.eq.s32.totalorder %s10, 0
      %p30 = por %p28, %p29
      %p31 = scmp.ne.s32.totalorder %s20, %s23
      %p32 = scmp.eq.s32.totalorder %s15, 1
      %p33 = por %p31, %p32
      %p34 = scmp.ne.s32.totalorder %s23, %s24
      %p35 = scmp.eq.s32.totalorder %s15, 0
      %p36 = por %p34, %p35
      %p37 = scmp.ne.s32.totalorder %s23, %s24
      %p38 = scmp.eq.s32.totalorder %s16, 1
      %p39 = por %p37, %p38
      %p41 = scmp.ne.s32.totalorder %s24, %s40
      %p42 = scmp.eq.s32.totalorder %s16, 0
      %p43 = por %p41, %p42
      %s44 = ssub.s32 %s10, %s17
      %p45 = scmp.eq.s32.totalorder %s44, 0
      %s47 = sadd.s32 %s46, 1
      %s48 = scalar_select %p45, %s46, %s47
      %p51 = pneg %p45
      %p52 = scmp.eq.s32.totalorder %s10, 1
      %p53 = por %p51, %p52
      %p54 = scmp.ne.s32.totalorder %s46, %s49
      %p55 = scmp.eq.s32.totalorder %s10, 0
      %p56 = por %p54, %p55
      %p57 = scmp.ne.s32.totalorder %s46, %s49
      %p58 = scmp.eq.s32.totalorder %s15, 1
      %p59 = por %p57, %p58
      %p60 = scmp.ne.s32.totalorder %s49, %s50
      %p61 = scmp.eq.s32.totalorder %s15, 0
      %p62 = por %p60, %p61
      %p63 = scmp.ne.s32.totalorder %s49, %s50
      %p64 = scmp.eq.s32.totalorder %s16, 1
      %p65 = por %p63, %p64
      %p67 = scmp.ne.s32.totalorder %s50, %s66
      %p68 = scmp.eq.s32.totalorder %s16, 0
      %p69 = por %p67, %p68
      %p70 = scmp.le.s32.totalorder 1, %s10
      %p71 = scmp.lt.s32.totalorder %s10, 3
      %p72 = pnand %p70, %p71
      %p73 = pneg %p72
      // Predicated region
      $region9: #{tpu_custom_call.1} parent=5 // pred_check
        _
      $region10: #{tpu_custom_call.1} parent=5 // pred_check_branch
        %75 = sbr.rel (%p72) target = $region12
      $region11: #{tpu_custom_call.1} parent=5 // pred_region
        %s76 = ssub.s32 %s10, 1
      $region12: #{tpu_custom_call.1} parent=5 // pred_fallthru
        _
      %p77 = scmp.lt.s32.totalorder %s10, 2
      // Predicated region
      $region13: #{tpu_custom_call.1} parent=5 // pred_check
        %p78 = pneg %p77
      $region14: #{tpu_custom_call.1} parent=5 // pred_check_branch
        %80 = sbr.rel (%p78) target = $region16
      $region15: #{tpu_custom_call.1} parent=5 // pred_region
        // Predicated region
        $region17: #{tpu_custom_call.1} parent=15 // pred_check
          %p81 = pneg %p30
        $region18: #{tpu_custom_call.1} parent=15 // pred_check_branch
          %83 = sbr.rel (%p81) target = $region20
        $region19: #{tpu_custom_call.1} parent=15 // pred_region
          %s84 = sand.u32 %s20, 1
          %s85 = scalar_lea.sflag [#allocation4], %s84
          %s86 = sand.u32 %s20, 1
          %s87 = smul.addr %s86, 16
          %s88 = scalar_lea.vmem [#allocation3], %s87
          %s90 = ssub.s32 256, 256
          %91 = vsyncadd %s85, %s90
          %s92 = smul.addr %s10, 2
          %s93 = smul.addr %s92, 128
          %s94 = scalar_lea.hbm %s0, %s93
          %s95 = sshll.u32 %s88, 4
          %s96 = int_to_ptr.vmem [resolvable:$true] %s95
          %101 = dma.hbm_to_vmem [thread:$0]  %s94, 256, %s96, %s85, 128, 128, 8
        $region20: #{tpu_custom_call.1} parent=15 // pred_fallthru
          _
      $region16: #{tpu_custom_call.1} parent=5 // pred_fallthru
        _
      %p102 = scmp.le.s32.totalorder 1, %s10
      %p103 = scmp.lt.s32.totalorder %s10, 3
      %p104 = pnand %p102, %p103
      %p105 = pneg %p104
      // Predicated region
      $region21: #{tpu_custom_call.1} parent=5 // pred_check
        _
      $region22: #{tpu_custom_call.1} parent=5 // pred_check_branch
        %107 = sbr.rel (%p104) target = $region24
      $region23: #{tpu_custom_call.1} parent=5 // pred_region
        %s108 = ssub.s32 %s10, 1
        %s109 = sand.u32 %s23, 1
        %s110 = scalar_lea.sflag [#allocation4], %s109
        %s111 = sand.u32 %s23, 1
        %s112 = smul.addr %s111, 16
        %s113 = scalar_lea.vmem [#allocation3], %s112
        // Predicated region
        $region25: #{tpu_custom_call.1} parent=23 // pred_check
          %p114 = pneg %p36
        $region26: #{tpu_custom_call.1} parent=23 // pred_check_branch
          %116 = sbr.rel (%p114) target = $region28
        $region27: #{tpu_custom_call.1} parent=23 // pred_region
          %117 = dma.done %s110, 256
        $region28: #{tpu_custom_call.1} parent=23 // pred_fallthru
          _
        %s118 = sand.u32 %s23, 1
        %s119 = scalar_lea.sflag [#allocation4], %s118
        %s120 = sand.u32 %s23, 1
        %s121 = smul.addr %s120, 16
        %s122 = scalar_lea.vmem [#allocation3], %s121
        %p123 = pneg %p36
        %p124 = pneg %p33
        %p125 = pneg %p62
        %p126 = pneg %p59
        %p127 = scmp.lt.s32.totalorder %s15, 1
        %s128 = scalar_select %p127, %s15, 1
        %s129 = smul.addr %s128, 2
        %s130 = smul.addr %s129, 8
        %s131 = scalar_lea.vmem %s1, %s130
        %p132 = scmp.lt.s32.totalorder %s15, 1
        %s133 = scalar_select %p132, %s15, 1
        %s134 = smul.addr %s133, 2
        %s135 = smul.addr %s134, 8
        %s136 = scalar_lea.vmem %s1, %s135
        %v137 = vld [vmem:[%s113] sm:$0xff]
        %v138 = vld [vmem:[%s113 + $0x8] sm:$0xff]
        %v139 = vlaneseq
        %v140 = vshrl.u32 %v139, 7
        %v141 = vadd.s32 %v140, 8
        %v142 = vlaneseq
        %v143 = vand.u32 %v142, 127
        %v144 = vsub.s32 %v140, %v143
        %v145 = vsub.s32 %v141, %v143
        %vm146 = vcmp.eq.s32.totalorder %v144, 0
        %vm147 = vcmp.eq.s32.totalorder %v145, 0
        %v148 = vsel %vm146, 0.054488685, 0.0
        %v149 = vsel %vm147, 0.054488685, 0.0
        %vm150 = vcmp.eq.s32.totalorder %v144, 1
        %vm151 = vcmp.eq.s32.totalorder %v145, 1
        %v152 = vsel %vm150, 0.24420135, %v148
        %v153 = vsel %vm151, 0.24420135, %v149
        %vm154 = vcmp.eq.s32.totalorder %v144, 2
        %vm155 = vcmp.eq.s32.totalorder %v145, 2
        %v156 = vsel %vm154, 0.40261996, %v152
        %v157 = vsel %vm155, 0.40261996, %v153
        %vm158 = vcmp.eq.s32.totalorder %v144, 3
        %vm159 = vcmp.eq.s32.totalorder %v145, 3
        %v160 = vsel %vm158, 0.24420135, %v156
        %v161 = vsel %vm159, 0.24420135, %v157
        %vm162 = vcmp.eq.s32.totalorder %v144, 4
        %vm163 = vcmp.eq.s32.totalorder %v145, 4
        %v164 = vsel %vm162, 0.054488685, %v160
        %v165 = vsel %vm163, 0.054488685, %v161
        %vm166 = vcmask 130048
        %v168 = vsel %vm166, %v137, 0
        %v171 = vsel %vm166, %v138, 0
        %173 = vmatprep.subr.mxu0 0.0
        %174 = vmatpush1.msra.mxu0 %v164
        %175 = vmatprep.subr.mxu0 0.0
        %176 = vmatpush1.msra.mxu0 %v165
        %177 = vmatprep.subr.mxu0 0.0
        %178 = vmatpush1.msra.mxu0 0.0
        %179 = vmatprep.subr.mxu0 0.0
        %180 = vmatpush1.msra.mxu0 0.0
        %181 = vmatprep.subr.mxu0 0.0
        %182 = vmatpush1.msra.mxu0 0.0
        %183 = vmatprep.subr.mxu0 0.0
        %184 = vmatpush1.msra.mxu0 0.0
        %185 = vmatprep.subr.mxu0 0.0
        %186 = vmatpush1.msra.mxu0 0.0
        %187 = vmatprep.subr.mxu0 0.0
        %188 = vmatpush1.msra.mxu0 0.0
        %189 = vmatprep.subr.mxu0 0.0
        %190 = vmatpush1.msra.mxu0 0.0
        %191 = vmatprep.subr.mxu0 0.0
        %192 = vmatpush1.msra.mxu0 0.0
        %193 = vmatprep.subr.mxu0 0.0
        %194 = vmatpush1.msra.mxu0 0.0
        %195 = vmatprep.subr.mxu0 0.0
        %196 = vmatpush1.msra.mxu0 0.0
        %197 = vmatprep.subr.mxu0 0.0
        %198 = vmatpush1.msra.mxu0 0.0
        %199 = vmatprep.subr.mxu0 0.0
        %200 = vmatpush1.msra.mxu0 0.0
        %201 = vmatprep.subr.mxu0 0.0
        %202 = vmatpush1.msra.mxu0 0.0
        %203 = vmatprep.subr.mxu0 0.0
        %204 = vmatpush1.msra.mxu0 0.0
        %205 = vmatprep.subr.mxu0 0.0
        %206 = vmatpush1.msra.mxu0 0.0
        %207 = vmatprep.subr.mxu0 0.0
        %208 = vmatpush1.msra.mxu0 0.0
        %209 = vmatprep.subr.mxu0 0.0
        %210 = vmatpush1.msra.mxu0 0.0
        %211 = vmatprep.subr.mxu0 0.0
        %212 = vmatpush1.msra.mxu0 0.0
        %213 = vmatprep.subr.mxu0 0.0
        %214 = vmatpush1.msra.mxu0 0.0
        %215 = vmatprep.subr.mxu0 0.0
        %216 = vmatpush1.msra.mxu0 0.0
        %217 = vmatprep.subr.mxu0 0.0
        %218 = vmatpush1.msra.mxu0 0.0
        %219 = vmatprep.subr.mxu0 0.0
        %220 = vmatpush1.msra.mxu0 0.0
        %221 = vmatprep.subr.mxu0 0.0
        %222 = vmatpush1.msra.mxu0 0.0
        %223 = vmatprep.subr.mxu0 0.0
        %224 = vmatpush1.msra.mxu0 0.0
        %225 = vmatprep.subr.mxu0 0.0
        %226 = vmatpush1.msra.mxu0 0.0
        %227 = vmatprep.subr.mxu0 0.0
        %228 = vmatpush1.msra.mxu0 0.0
        %229 = vmatprep.subr.mxu0 0.0
        %230 = vmatpush1.msra.mxu0 0.0
        %231 = vmatprep.subr.mxu0 0.0
        %232 = vmatpush1.msra.mxu0 0.0
        %233 = vmatprep.subr.mxu0 0.0
        %234 = vmatpush1.msra.mxu0 0.0
        %235 = vmatprep.subr.mxu0 0.0
        %236 = vmatpush1.msra.mxu0 0.0
        %237 = vmatprep.mubr.f32.mxu0 0.0
        %238 = vmatmul.mubr.f32.gmra.mrb[0].mxu0 %v168
        %v239 = vpop.f32.mrb[0].mxu0
        %v240 = vadd.f32 0.0, %v239
        %v241 = vpop.f32.mrb[0].mxu0
        %242 = vmatprep.mubr.f32.mxu0 0.0
        %243 = vmatmul.mubr.f32.gmra.mrb[0].mxu0 %v171
        %v244 = vpop.f32.mrb[0].mxu0
        %v245 = vadd.f32 0.0, %v244
        %v246 = vpop.f32.mrb[0].mxu0
        %247 = vdwg.mxu0
        %vm248 = vcmask 97280
        %249 = vst.msk [vmem:[#allocation2] sm:$0xff] %vm248, %v240
        %250 = vst.msk [vmem:[#allocation2 + $0x8] sm:$0xff] %vm248, %v245
        %v251 = vld [vmem:[#allocation2] sm:$0xff]
        %v252 = vld [vmem:[#allocation2 + $0x8] sm:$0xf]
        %v253 = vmul.f32 %v251, 0.054488685
        %v254 = vmul.f32 %v252, 0.054488685
        %v255 = vld [vmem:[#allocation2 + $0x1] sm:$0xff]
        %v256 = vld [vmem:[#allocation2 + $0x9] sm:$0xf]
        %v257 = vmul.f32 %v255, 0.24420135
        %v258 = vmul.f32 %v256, 0.24420135
        %v259 = vadd.f32 %v253, %v257
        %v260 = vadd.f32 %v254, %v258
        %v261 = vld [vmem:[#allocation2 + $0x2] sm:$0xff]
        %v262 = vld [vmem:[#allocation2 + $0xa] sm:$0xf]
        %v263 = vmul.f32 %v261, 0.40261996
        %v264 = vmul.f32 %v262, 0.40261996
        %v265 = vadd.f32 %v259, %v263
        %v266 = vadd.f32 %v260, %v264
        %v267 = vld [vmem:[#allocation2 + $0x3] sm:$0xff]
        %v268 = vld [vmem:[#allocation2 + $0xb] sm:$0xf]
        %v269 = vmul.f32 %v267, 0.24420135
        %v270 = vmul.f32 %v268, 0.24420135
        %v271 = vadd.f32 %v265, %v269
        %v272 = vadd.f32 %v266, %v270
        %v273 = vld [vmem:[#allocation2 + $0x4] sm:$0xff]
        %v274 = vld [vmem:[#allocation2 + $0xc] sm:$0xf]
        %v275 = vmul.f32 %v273, 0.054488685
        %v276 = vmul.f32 %v274, 0.054488685
        %v277 = vadd.f32 %v271, %v275
        %v278 = vadd.f32 %v272, %v276
        %279 = vst.msk [vmem:[%s136] sm:$0xff] %vm248, %v277
        %vm280 = vcmask 93184
        %281 = vst.msk [vmem:[%s136 + $0x8] sm:$0xf] %vm280, %v278
        %p282 = scmp.lt.s32.totalorder %s15, 1
        %s283 = scalar_select %p282, %s15, 1
        %s284 = smul.addr %s283, 2
        %s285 = smul.addr %s284, 8
        %s286 = scalar_lea.vmem %s1, %s285
        // Predicated region
        $region29: #{tpu_custom_call.1} parent=23 // pred_check
          %p287 = pneg %p59
        $region30: #{tpu_custom_call.1} parent=23 // pred_check_branch
          %289 = sbr.rel (%p287) target = $region32
        $region31: #{tpu_custom_call.1} parent=23 // pred_region
          _
        $region32: #{tpu_custom_call.1} parent=23 // pred_fallthru
          _
      $region24: #{tpu_custom_call.1} parent=5 // pred_fallthru
        _
      %p290 = scmp.le.s32.totalorder 2, %s10
      // Predicated region
      $region33: #{tpu_custom_call.1} parent=5 // pred_check
        %p291 = pneg %p290
      $region34: #{tpu_custom_call.1} parent=5 // pred_check_branch
        %293 = sbr.rel (%p291) target = $region36
      $region35: #{tpu_custom_call.1} parent=5 // pred_region
        %s294 = ssub.s32 %s10, 2
        // Predicated region
        $region37: #{tpu_custom_call.1} parent=35 // pred_check
          %p295 = pneg %p65
        $region38: #{tpu_custom_call.1} parent=35 // pred_check_branch
          %297 = sbr.rel (%p295) target = $region40
        $region39: #{tpu_custom_call.1} parent=35 // pred_region
          %p298 = scmp.lt.s32.totalorder %s16, 1
          %s299 = scalar_select %p298, %s16, 1
          %s300 = smul.addr %s299, 2
          %s301 = smul.addr %s300, 8
          %s302 = scalar_lea.vmem %s1, %s301
        $region40: #{tpu_custom_call.1} parent=35 // pred_fallthru
          _
      $region36: #{tpu_custom_call.1} parent=5 // pred_fallthru
        _
    $region6: #{tpu_custom_call.1} parent=1 // loop_footer
      %s14 = sadd.s32 1, %s10
    $region7: #{tpu_custom_call.1} parent=1 // loop_footer_branch
      %9 = sbr.rel target = $region3
    $region8: #{tpu_custom_call.1} parent=1 // loop_exit
      _
    %303 = vsyncpa [#allocation4], 1
    %s304 = scalar_lea.sflag [#allocation4], 1
    %305 = vsyncpa %s304, 1

</llo_original>
